<compile_context>
chip_gen: v5e
topology: v5e:2x2
jax: 0.10.0
libtpu: 0.0.40
codegen_flags: <defaults>
</compile_context>

<pallas_src>
import functools

import jax
import jax.numpy as jnp
from jax.experimental import pallas as pl
from jax.experimental.pallas import tpu as pltpu


def _add3_kernel(x149_ref, x134_ref, x165_ref, out_ref):
    # Minimal body: 3 loads, 2 adds, 1 store per vreg.
    out_ref[...] = x165_ref[...] + (x149_ref[...] + x134_ref[...])


# Per-operand size above which we switch to the tiled (pipelined) path.
_SMALL_BYTES_PER_OPERAND = 4 << 20  # 4 MiB


def _lane_dense_2d(numel):
    """Flat 2D shape: keep all 8 sublanes live, maximize lane density."""
    for rows in (8, 16, 4, 2):
        if numel % rows == 0:
            return rows, numel // rows
    return 1, numel


def _tiled_2d(numel):
    """Large-tensor shape: lane-dense (multiple-of-128) last dim, or None."""
    for cols in (4096, 2048, 1024, 512, 256, 128):
        if numel % cols == 0:
            return numel // cols, cols
    return None


@functools.partial(jax.jit, donate_argnums=(2,))
def add3(x149, x134, x165):
    """(x149 + x134) + x165 as a single Pallas TPU kernel.

    Inputs are identically-shaped NCHW tensors.  x165 is donated: its HBM
    buffer is reused for the output on the small (whole-array) path.
    """
    assert x149.shape == x134.shape == x165.shape
    assert x149.dtype == x134.dtype == x165.dtype
    orig_shape = x149.shape
    numel = x149.size
    itemsize = jnp.dtype(x149.dtype).itemsize

    # 3 loads + 1 store of `numel` elements, 2 adds per element.
    cost = pl.CostEstimate(
        flops=2 * numel,
        transcendentals=0,
        bytes_accessed=4 * numel * itemsize,
    )

    operand_bytes = numel * itemsize
    tiled = _tiled_2d(numel) if operand_bytes > _SMALL_BYTES_PER_OPERAND else None

    if tiled is None:
        # --- Small path (this module's shape): one whole-array block. ---
        shape2d = _lane_dense_2d(numel)          # (8, 2744) for 1x112x14x14
        a = x149.reshape(shape2d)
        b = x134.reshape(shape2d)
        d = x165.reshape(shape2d)

        # Whole array as one block: block_shape == full array dims is allowed
        # even when dims aren't multiples of (8, 128).  grid=() keeps it on
        # one TensorCore with zero per-step overhead.
        spec = pl.BlockSpec(shape2d, lambda: (0, 0))

        out2d = pl.pallas_call(
            _add3_kernel,
            out_shape=jax.ShapeDtypeStruct(shape2d, x149.dtype),
            grid=(),
            in_specs=[spec, spec, spec],
            out_specs=spec,
            # Output reuses x165's buffer (input index 2 -> output index 0).
            # Safe here: single whole-array block, input DMA completes before
            # output writeback.
            input_output_aliases={2: 0},
            cost_estimate=cost,
        )(a, b, d)
        return out2d.reshape(orig_shape)

    # --- Large-tensor path: lane-dense tiled 1-D grid, pipelined. ---
    rows, cols = tiled
    a = x149.reshape(rows, cols)
    b = x134.reshape(rows, cols)
    d = x165.reshape(rows, cols)

    # Per-operand block <= ~2 MiB -> 4 operands x 2 buffers <= ~16 MiB VMEM,
    # comfortably under v7x's 32 MiB scoped default (64 MiB physical).
    max_block_rows = max(8, ((2 << 20) // (cols * itemsize)) // 8 * 8)
    block_rows = min(rows, max_block_rows)
    grid = (pl.cdiv(rows, block_rows),)
    spec = pl.BlockSpec((block_rows, cols), lambda i: (i, 0))

    out2d = pl.pallas_call(
        _add3_kernel,
        out_shape=jax.ShapeDtypeStruct((rows, cols), x149.dtype),
        grid=grid,
        in_specs=[spec, spec, spec],
        out_specs=spec,
        # No input/output aliasing here: avoids RAW hazards between the
        # aliased input prefetch and output writeback across pipeline stages.
        cost_estimate=cost,
        compiler_params=pltpu.CompilerParams(
            dimension_semantics=("parallel",)),
    )(a, b, d)
    return out2d.reshape(orig_shape)


if __name__ == "__main__":
    key = jax.random.PRNGKey(0)
    k1, k2, k3 = jax.random.split(key, 3)
    shape = (1, 112, 14, 14)  # matches the PyTorch module's tensors
    x134 = jax.random.normal(k1, shape, dtype=jnp.float32)
    x149 = jax.random.normal(k2, shape, dtype=jnp.float32)
    x165 = jax.random.normal(k3, shape, dtype=jnp.float32)

    # Reference computed BEFORE the kernel call: x165 is donated to the
    # kernel and must not be read afterwards.
    ref = x165 + (x149 + x134)

    out = add3(x149, x134, x165)
    out = jax.block_until_ready(out)

    assert out.shape == shape
    assert jnp.allclose(out, ref, atol=1e-6), "mismatch vs reference"

    print("KERNEL_OK")
</pallas_src>

<mosaic_0001>
module attributes {stable_mosaic.version = 11 : i64} {
  func.func @_add3_kernel(%arg0: memref<8x2744xf32, #tpu.memory_space<vmem>>, %arg1: memref<8x2744xf32, #tpu.memory_space<vmem>>, %arg2: memref<8x2744xf32, #tpu.memory_space<vmem>>, %arg3: memref<8x2744xf32, #tpu.memory_space<vmem>>) attributes {dimension_semantics = [], scalar_prefetch = 0 : i64, scratch_operands = 0 : i64, tpu.core_type = #tpu.core_type<tc>} {
    %c0 = arith.constant 0 : index
    %c0_0 = arith.constant 0 : index
    %0 = vector.load %arg2[%c0, %c0_0] : memref<8x2744xf32, #tpu.memory_space<vmem>>, vector<8x2744xf32>
    %c0_1 = arith.constant 0 : index
    %c0_2 = arith.constant 0 : index
    %1 = vector.load %arg0[%c0_1, %c0_2] : memref<8x2744xf32, #tpu.memory_space<vmem>>, vector<8x2744xf32>
    %c0_3 = arith.constant 0 : index
    %c0_4 = arith.constant 0 : index
    %2 = vector.load %arg1[%c0_3, %c0_4] : memref<8x2744xf32, #tpu.memory_space<vmem>>, vector<8x2744xf32>
    %3 = arith.addf %1, %2 : vector<8x2744xf32>
    %4 = arith.addf %0, %3 : vector<8x2744xf32>
    %c0_5 = arith.constant 0 : index
    %c0_6 = arith.constant 0 : index
    %5 = vector.load %arg3[%c0_5, %c0_6] : memref<8x2744xf32, #tpu.memory_space<vmem>>, vector<8x2744xf32>
    tpu.vector_store %arg3[%c0_5, %c0_6], %4 {strides = array<i32>} : memref<8x2744xf32, #tpu.memory_space<vmem>>, vector<8x2744xf32>,
    return
  }
}

</mosaic_0001>

<llo_original>
// kernel: add3.1
$region0: #{add3.1}
  #allocation0 [shape = 'u32[]', space=smem, size = 0x4, offset = 0x4, fixed_abs, tag = 'smem constant byte address 0x4 - core index']
  #allocation1 [shape = 'u32[72,128]{1,0:T(1,128)}', space=vmem, size = 0x9000, scoped, tag = 'internal scratch']
  %s0 = inlined_call_operand.vmem [shape: f32[8,2744], index: 0, kind: input, shape index: {}]
  %s1 = inlined_call_operand.vmem [shape: f32[8,2744], index: 1, kind: input, shape index: {}]
  %s2 = inlined_call_operand.vmem [shape: f32[8,2744], index: 2, kind: input, shape index: {}, may-alias: {2,3}]
  %s3 = inlined_call_operand.vmem [shape: f32[8,2744], index: 3, kind: output, shape index: {}, may-alias: {2,3}]
  %s4 = sld [smem:[#allocation0]]
  $region22: #{add3.1} parent=0
    _
  %s6 = ssub.s32 1, %s4
  %s7 = scalar_select 0, %s6, %s4
  // Predicated region
  $region2: #{add3.1} parent=0 // pred_check
    _
  $region3: #{add3.1} parent=0 // pred_check_branch
    %9 = sbr.rel (0) target = $region5
  $region4: #{add3.1} parent=0 // pred_region
    _
  $region5: #{add3.1} parent=0 // pred_fallthru
    _
  // Predicated region
  $region6: #{add3.1} parent=0 // pred_check
    _
  $region7: #{add3.1} parent=0 // pred_check_branch
    %11 = sbr.rel (0) target = $region9
  $region8: #{add3.1} parent=0 // pred_region
    _
  $region9: #{add3.1} parent=0 // pred_fallthru
    _
  // Predicated region
  $region10: #{add3.1} parent=0 // pred_check
    _
  $region11: #{add3.1} parent=0 // pred_check_branch
    %13 = sbr.rel (0) target = $region13
  $region12: #{add3.1} parent=0 // pred_region
    _
  $region13: #{add3.1} parent=0 // pred_fallthru
    _
  %v14 = vld [vmem:[%s2] sm:$0xff]
  %v15 = vld [vmem:[%s2 + $0x8] sm:$0xff]
  %v16 = vld [vmem:[%s2 + $0x10] sm:$0xff]
  %v17 = vld [vmem:[%s2 + $0x18] sm:$0xff]
  %v18 = vld [vmem:[%s2 + $0x20] sm:$0xff]
  %v19 = vld [vmem:[%s2 + $0x28] sm:$0xff]
  %v20 = vld [vmem:[%s2 + $0x30] sm:$0xff]
  %v21 = vld [vmem:[%s2 + $0x38] sm:$0xff]
  %v22 = vld [vmem:[%s2 + $0x40] sm:$0xff]
  %v23 = vld [vmem:[%s2 + $0x48] sm:$0xff]
  %v24 = vld [vmem:[%s2 + $0x50] sm:$0xff]
  %v25 = vld [vmem:[%s2 + $0x58] sm:$0xff]
  %v26 = vld [vmem:[%s2 + $0x60] sm:$0xff]
  %v27 = vld [vmem:[%s2 + $0x68] sm:$0xff]
  %v28 = vld [vmem:[%s2 + $0x70] sm:$0xff]
  %v29 = vld [vmem:[%s2 + $0x78] sm:$0xff]
  %v30 = vld [vmem:[%s2 + $0x80] sm:$0xff]
  %v31 = vld [vmem:[%s2 + $0x88] sm:$0xff]
  %v32 = vld [vmem:[%s2 + $0x90] sm:$0xff]
  %v33 = vld [vmem:[%s2 + $0x98] sm:$0xff]
  %v34 = vld [vmem:[%s2 + $0xa0] sm:$0xff]
  %v35 = vld [vmem:[%s2 + $0xa8] sm:$0xff]
  %v36 = vld [vmem:[%s0] sm:$0xff]
  %v37 = vld [vmem:[%s0 + $0x8] sm:$0xff]
  %v38 = vld [vmem:[%s0 + $0x10] sm:$0xff]
  %v39 = vld [vmem:[%s0 + $0x18] sm:$0xff]
  %v40 = vld [vmem:[%s0 + $0x20] sm:$0xff]
  %v41 = vld [vmem:[%s0 + $0x28] sm:$0xff]
  %v42 = vld [vmem:[%s0 + $0x30] sm:$0xff]
  %v43 = vld [vmem:[%s0 + $0x38] sm:$0xff]
  %v44 = vld [vmem:[%s0 + $0x40] sm:$0xff]
  %v45 = vld [vmem:[%s0 + $0x48] sm:$0xff]
  %v46 = vld [vmem:[%s0 + $0x50] sm:$0xff]
  %v47 = vld [vmem:[%s0 + $0x58] sm:$0xff]
  %v48 = vld [vmem:[%s0 + $0x60] sm:$0xff]
  %v49 = vld [vmem:[%s0 + $0x68] sm:$0xff]
  %v50 = vld [vmem:[%s0 + $0x70] sm:$0xff]
  %v51 = vld [vmem:[%s0 + $0x78] sm:$0xff]
  %v52 = vld [vmem:[%s0 + $0x80] sm:$0xff]
  %v53 = vld [vmem:[%s0 + $0x88] sm:$0xff]
  %v54 = vld [vmem:[%s0 + $0x90] sm:$0xff]
  %v55 = vld [vmem:[%s0 + $0x98] sm:$0xff]
  %v56 = vld [vmem:[%s0 + $0xa0] sm:$0xff]
  %v57 = vld [vmem:[%s0 + $0xa8] sm:$0xff]
  %v58 = vld [vmem:[%s1] sm:$0xff]
  %v59 = vld [vmem:[%s1 + $0x8] sm:$0xff]
  %v60 = vld [vmem:[%s1 + $0x10] sm:$0xff]
  %v61 = vld [vmem:[%s1 + $0x18] sm:$0xff]
  %v62 = vld [vmem:[%s1 + $0x20] sm:$0xff]
  %v63 = vld [vmem:[%s1 + $0x28] sm:$0xff]
  %v64 = vld [vmem:[%s1 + $0x30] sm:$0xff]
  %v65 = vld [vmem:[%s1 + $0x38] sm:$0xff]
  %v66 = vld [vmem:[%s1 + $0x40] sm:$0xff]
  %v67 = vld [vmem:[%s1 + $0x48] sm:$0xff]
  %v68 = vld [vmem:[%s1 + $0x50] sm:$0xff]
  %v69 = vld [vmem:[%s1 + $0x58] sm:$0xff]
  %v70 = vld [vmem:[%s1 + $0x60] sm:$0xff]
  %v71 = vld [vmem:[%s1 + $0x68] sm:$0xff]
  %v72 = vld [vmem:[%s1 + $0x70] sm:$0xff]
  %v73 = vld [vmem:[%s1 + $0x78] sm:$0xff]
  %v74 = vld [vmem:[%s1 + $0x80] sm:$0xff]
  %v75 = vld [vmem:[%s1 + $0x88] sm:$0xff]
  %v76 = vld [vmem:[%s1 + $0x90] sm:$0xff]
  %v77 = vld [vmem:[%s1 + $0x98] sm:$0xff]
  %v78 = vld [vmem:[%s1 + $0xa0] sm:$0xff]
  %v79 = vld [vmem:[%s1 + $0xa8] sm:$0xff]
  %v80 = vadd.f32 %v36, %v58
  %v81 = vadd.f32 %v37, %v59
  %v82 = vadd.f32 %v38, %v60
  %v83 = vadd.f32 %v39, %v61
  %v84 = vadd.f32 %v40, %v62
  %v85 = vadd.f32 %v41, %v63
  %v86 = vadd.f32 %v42, %v64
  %v87 = vadd.f32 %v43, %v65
  %v88 = vadd.f32 %v44, %v66
  %v89 = vadd.f32 %v45, %v67
  %v90 = vadd.f32 %v46, %v68
  %v91 = vadd.f32 %v47, %v69
  %v92 = vadd.f32 %v48, %v70
  %v93 = vadd.f32 %v49, %v71
  %v94 = vadd.f32 %v50, %v72
  %v95 = vadd.f32 %v51, %v73
  %v96 = vadd.f32 %v52, %v74
  %v97 = vadd.f32 %v53, %v75
  %v98 = vadd.f32 %v54, %v76
  %v99 = vadd.f32 %v55, %v77
  %v100 = vadd.f32 %v56, %v78
  %v101 = vadd.f32 %v57, %v79
  %v102 = vadd.f32 %v14, %v80
  %v103 = vadd.f32 %v15, %v81
  %v104 = vadd.f32 %v16, %v82
  %v105 = vadd.f32 %v17, %v83
  %v106 = vadd.f32 %v18, %v84
  %v107 = vadd.f32 %v19, %v85
  %v108 = vadd.f32 %v20, %v86
  %v109 = vadd.f32 %v21, %v87
  %v110 = vadd.f32 %v22, %v88
  %v111 = vadd.f32 %v23, %v89
  %v112 = vadd.f32 %v24, %v90
  %v113 = vadd.f32 %v25, %v91
  %v114 = vadd.f32 %v26, %v92
  %v115 = vadd.f32 %v27, %v93
  %v116 = vadd.f32 %v28, %v94
  %v117 = vadd.f32 %v29, %v95
  %v118 = vadd.f32 %v30, %v96
  %v119 = vadd.f32 %v31, %v97
  %v120 = vadd.f32 %v32, %v98
  %v121 = vadd.f32 %v33, %v99
  %v122 = vadd.f32 %v34, %v100
  %v123 = vadd.f32 %v35, %v101
  %124 = vst [vmem:[%s3] sm:$0xff] %v102
  %125 = vst [vmem:[%s3 + $0x8] sm:$0xff] %v103
  %126 = vst [vmem:[%s3 + $0x10] sm:$0xff] %v104
  %127 = vst [vmem:[%s3 + $0x18] sm:$0xff] %v105
  %128 = vst [vmem:[%s3 + $0x20] sm:$0xff] %v106
  %129 = vst [vmem:[%s3 + $0x28] sm:$0xff] %v107
  %130 = vst [vmem:[%s3 + $0x30] sm:$0xff] %v108
  %131 = vst [vmem:[%s3 + $0x38] sm:$0xff] %v109
  %132 = vst [vmem:[%s3 + $0x40] sm:$0xff] %v110
  %133 = vst [vmem:[%s3 + $0x48] sm:$0xff] %v111
  %134 = vst [vmem:[%s3 + $0x50] sm:$0xff] %v112
  %135 = vst [vmem:[%s3 + $0x58] sm:$0xff] %v113
  %136 = vst [vmem:[%s3 + $0x60] sm:$0xff] %v114
  %137 = vst [vmem:[%s3 + $0x68] sm:$0xff] %v115
  %138 = vst [vmem:[%s3 + $0x70] sm:$0xff] %v116
  %139 = vst [vmem:[%s3 + $0x78] sm:$0xff] %v117
  %140 = vst [vmem:[%s3 + $0x80] sm:$0xff] %v118
  %141 = vst [vmem:[%s3 + $0x88] sm:$0xff] %v119
  %142 = vst [vmem:[%s3 + $0x90] sm:$0xff] %v120
  %143 = vst [vmem:[%s3 + $0x98] sm:$0xff] %v121
  %144 = vst [vmem:[%s3 + $0xa0] sm:$0xff] %v122
  %vm145 = vcmask 457728
  %146 = vst.msk [vmem:[%s3 + $0xa8] sm:$0xff] %vm145, %v123
  // Predicated region
  $region14: #{add3.1} parent=0 // pred_check
    _
  $region15: #{add3.1} parent=0 // pred_check_branch
    %148 = sbr.rel (0) target = $region17
  $region16: #{add3.1} parent=0 // pred_region
    _
  $region17: #{add3.1} parent=0 // pred_fallthru
    _
  // Predicated region
  $region18: #{add3.1} parent=0 // pred_check
    _
  $region19: #{add3.1} parent=0 // pred_check_branch
    %150 = sbr.rel (0) target = $region21
  $region20: #{add3.1} parent=0 // pred_region
    _
  $region21: #{add3.1} parent=0 // pred_fallthru
    _

</llo_original>
